<compile_context>
chip_gen: v5e
topology: v5e:2x2
jax: 0.10.0
libtpu: 0.0.40
codegen_flags: <defaults>
</compile_context>

<pallas_src>
import functools

import jax
import jax.numpy as jnp
from jax import lax
from jax.experimental import pallas as pl
from jax.experimental.pallas import tpu as pltpu

EPS = 1e-5
MOMENTUM = 0.9


# --------------------------------------------------------------------------
# hardware-aware sizing
# --------------------------------------------------------------------------
def _hw_config():
    """(vmem_limit_bytes, per-tile budget, fused-path max x bytes)."""
    try:
        cap = int(pltpu.get_tpu_info().vmem_capacity_bytes)
    except Exception:                                   # pragma: no cover
        cap = 64 * 1024 * 1024                          # conservative fallback
    # 128 MiB chips (v5e/v6e) -> 96 MiB scoped; 64 MiB chips (v7x) -> 48 MiB.
    vmem_limit = min(cap * 3 // 4, 96 * 1024 * 1024)
    # pass-2 peak ~= 4x tile (in+out, double-buffered) + pass-1 scratch.
    tile_budget = vmem_limit // 6                       # 16 MiB v6e, 8 MiB v7x
    # fused path holds x + y + one temp in VMEM.
    fused_max_x = vmem_limit // 4                       # 24 MiB v6e, 12 MiB v7x
    return vmem_limit, tile_budget, fused_max_x


def _choose_tiles(n, c, hw, itemsize, budget):
    """Pick (tn, thw): thw a multiple of 128 dividing hw (or hw itself),
    tn a divisor of n, with tn*c*thw*itemsize <= budget."""
    if hw % 128 == 0:
        cands = [k * 128 for k in range(1, hw // 128 + 1) if hw % (k * 128) == 0]
    else:
        cands = [hw]
    fitting = [t for t in cands if c * t * itemsize <= budget]
    thw = max(fitting) if fitting else min(cands)
    tn = 1
    for d in range(1, n + 1):
        if n % d == 0 and d * c * thw * itemsize <= budget:
            tn = d
    return tn, thw


# --------------------------------------------------------------------------
# kernels
# --------------------------------------------------------------------------
def _fused_kernel(inv_m, x_ref, g_ref, b_ref, mm_ref, mv_ref,
                  y_ref, nmm_ref, nmv_ref):
    """Single-pass BN: x resident in VMEM -> exact centered variance + normalize."""
    x = x_ref[...]                                          # (N, C, HW)
    s = jnp.sum(x, axis=0)                                  # (C, HW)
    mean = jnp.sum(s, axis=1, keepdims=True) * inv_m        # (C, 1)
    centered = x - mean[None]                               # (N, C, HW)
    sq = jnp.sum(centered * centered, axis=0)               # (C, HW)
    var = jnp.sum(sq, axis=1, keepdims=True) * inv_m        # (C, 1)
    inv_std = lax.rsqrt(var + EPS)                          # EUP, C elements
    scale = g_ref[...] * inv_std                            # (C, 1)
    y_ref[...] = (centered * scale[None] + b_ref[...][None]).astype(y_ref.dtype)
    nmm_ref[...] = MOMENTUM * mm_ref[...] + (1.0 - MOMENTUM) * mean
    nmv_ref[...] = MOMENTUM * mv_ref[...] + (1.0 - MOMENTUM) * var


def _stats_kernel(x_ref, sum_ref, sumsq_ref, psum_ref, psumsq_ref):
    """Pass 1 (tiled): lane-wise partial sums via pure VPU adds, one final
    XLU lane reduce to (C,1) on the last grid step."""
    i = pl.program_id(0)
    j = pl.program_id(1)
    first = jnp.logical_and(i == 0, j == 0)
    last = jnp.logical_and(i == pl.num_programs(0) - 1,
                           j == pl.num_programs(1) - 1)

    @pl.when(first)
    def _init():
        psum_ref[...] = jnp.zeros_like(psum_ref)
        psumsq_ref[...] = jnp.zeros_like(psumsq_ref)

    x = x_ref[...]                                          # (tn, C, thw)
    psum_ref[...] += jnp.sum(x, axis=0)                     # (C, thw) VPU adds
    psumsq_ref[...] += jnp.sum(x * x, axis=0)               # (C, thw)

    @pl.when(last)
    def _finalize():
        sum_ref[...] = jnp.sum(psum_ref[...], axis=1, keepdims=True)
        sumsq_ref[...] = jnp.sum(psumsq_ref[...], axis=1, keepdims=True)


def _norm_kernel(x_ref, scale_ref, shift_ref, y_ref):
    """Pass 2 (tiled): y = x * scale + shift (per-channel fused affine)."""
    scale = scale_ref[...][None]                            # (1, C, 1)
    shift = shift_ref[...][None]
    y_ref[...] = x_ref[...] * scale + shift


# --------------------------------------------------------------------------
# wrapper
# --------------------------------------------------------------------------
@functools.partial(jax.jit, static_argnames=("force_two_pass", "tile_budget_bytes"))
def batch_norm_pallas(x_nchw, gamma, beta, moving_mean, moving_var,
                      *, force_two_pass=False, tile_budget_bytes=None):
    """Training-mode BatchNorm forward (num_dims == 4 case).

    x_nchw:           (N, C, H, W) float32
    gamma, beta:      (1, C, 1, 1) float32
    moving_mean/var:  (1, C, 1, 1) float32
    Returns (Y, new_moving_mean, new_moving_var) with matching shapes.
    """
    n, c, h, w = x_nchw.shape
    hw = h * w
    m = n * hw
    inv_m = 1.0 / float(m)

    # NCHW-native: pure reshapes only (no transpose, no extra HBM traffic).
    x3 = x_nchw.reshape(n, c, hw).astype(jnp.float32)
    g = gamma.reshape(c, 1).astype(jnp.float32)
    b = beta.reshape(c, 1).astype(jnp.float32)
    mm = moving_mean.reshape(c, 1).astype(jnp.float32)
    mv = moving_var.reshape(c, 1).astype(jnp.float32)

    vmem_limit, auto_budget, fused_max_x = _hw_config()
    budget = int(tile_budget_bytes) if tile_budget_bytes is not None else auto_budget

    itemsize = 4
    x_bytes = n * c * hw * itemsize
    vec_bytes = c * 1 * itemsize

    full_x_spec_1d = pl.BlockSpec((n, c, hw), lambda i: (0, 0, 0))
    vec_spec_1d = pl.BlockSpec((c, 1), lambda i: (0, 0))

    if (not force_two_pass) and x_bytes <= fused_max_x:
        # ------------------ fused single-pass fast path --------------------
        y3, new_mm, new_mv = pl.pallas_call(
            functools.partial(_fused_kernel, inv_m),
            out_shape=(
                jax.ShapeDtypeStruct((n, c, hw), jnp.float32),
                jax.ShapeDtypeStruct((c, 1), jnp.float32),
                jax.ShapeDtypeStruct((c, 1), jnp.float32),
            ),
            grid_spec=pltpu.PrefetchScalarGridSpec(
                num_scalar_prefetch=0,
                grid=(1,),
                in_specs=[full_x_spec_1d, vec_spec_1d, vec_spec_1d,
                          vec_spec_1d, vec_spec_1d],
                out_specs=(full_x_spec_1d, vec_spec_1d, vec_spec_1d),
            ),
            compiler_params=pltpu.CompilerParams(
                dimension_semantics=("arbitrary",),
                vmem_limit_bytes=vmem_limit),
            cost_estimate=pl.CostEstimate(
                flops=int(6 * m * c),
                transcendentals=int(c),
                bytes_accessed=int(2 * x_bytes + 6 * vec_bytes)),
        )(x3, g, b, mm, mv)
    else:
        # ------------------ tiled two-pass path -----------------------------
        tn, thw = _choose_tiles(n, c, hw, itemsize, budget)
        grid = (n // tn, hw // thw)

        x_spec = pl.BlockSpec((tn, c, thw), lambda i, j: (i, 0, j))
        vec_spec = pl.BlockSpec((c, 1), lambda i, j: (0, 0))

        # pass 1: raw per-channel sum / sum-of-squares
        sum_c, sumsq_c = pl.pallas_call(
            _stats_kernel,
            out_shape=(
                jax.ShapeDtypeStruct((c, 1), jnp.float32),
                jax.ShapeDtypeStruct((c, 1), jnp.float32),
            ),
            grid_spec=pltpu.PrefetchScalarGridSpec(
                num_scalar_prefetch=0,
                grid=grid,
                in_specs=[x_spec],
                out_specs=(vec_spec, vec_spec),
                scratch_shapes=[pltpu.VMEM((c, thw), jnp.float32),
                                pltpu.VMEM((c, thw), jnp.float32)],
            ),
            compiler_params=pltpu.CompilerParams(
                dimension_semantics=("arbitrary", "arbitrary"),
                vmem_limit_bytes=vmem_limit),
            cost_estimate=pl.CostEstimate(
                flops=int(3 * m * c),
                transcendentals=0,
                bytes_accessed=int(x_bytes + 2 * vec_bytes)),
        )(x3)

        # finalize (O(C) work) in plain JAX — no in-kernel vreg pressure.
        mean = sum_c * inv_m
        var = sumsq_c * inv_m - mean * mean
        inv_std = lax.rsqrt(var + EPS)
        scale = g * inv_std
        shift = b - mean * scale
        new_mm = MOMENTUM * mm + (1.0 - MOMENTUM) * mean
        new_mv = MOMENTUM * mv + (1.0 - MOMENTUM) * var

        # pass 2: normalize (independent tiles -> parallel / megacore)
        y3 = pl.pallas_call(
            _norm_kernel,
            out_shape=jax.ShapeDtypeStruct((n, c, hw), jnp.float32),
            grid_spec=pltpu.PrefetchScalarGridSpec(
                num_scalar_prefetch=0,
                grid=grid,
                in_specs=[x_spec, vec_spec, vec_spec],
                out_specs=x_spec,
            ),
            compiler_params=pltpu.CompilerParams(
                dimension_semantics=("parallel", "parallel"),
                vmem_limit_bytes=vmem_limit),
            cost_estimate=pl.CostEstimate(
                flops=int(2 * m * c),
                transcendentals=0,
                bytes_accessed=int(2 * x_bytes + 4 * vec_bytes)),
        )(x3, scale, shift)

    y = y3.reshape(n, c, h, w)
    return (y,
            new_mm.reshape(1, c, 1, 1),
            new_mv.reshape(1, c, 1, 1))


# --------------------------------------------------------------------------
# pure-JAX reference (mirrors the PyTorch training-mode code path)
# --------------------------------------------------------------------------
def batch_norm_ref(x, gamma, beta, moving_mean, moving_var):
    mean = jnp.mean(x, axis=(0, 2, 3), keepdims=True)
    var = jnp.mean((x - mean) ** 2, axis=(0, 2, 3), keepdims=True)
    x_hat = (x - mean) / jnp.sqrt(var + EPS)
    y = gamma * x_hat + beta
    new_mm = MOMENTUM * moving_mean + (1.0 - MOMENTUM) * mean
    new_mv = MOMENTUM * moving_var + (1.0 - MOMENTUM) * var
    return y, new_mm, new_mv


if __name__ == "__main__":
    # ---- case 1: module-sized input -> fused single-pass path -------------
    N, C, H, W = 2, 4, 16, 16
    kx, kg, kb, kx2 = jax.random.split(jax.random.PRNGKey(0), 4)

    x = jax.random.normal(kx, (N, C, H, W), dtype=jnp.float32)
    gamma = 1.0 + 0.1 * jax.random.normal(kg, (1, C, 1, 1), dtype=jnp.float32)
    beta = 0.1 * jax.random.normal(kb, (1, C, 1, 1), dtype=jnp.float32)
    moving_mean = jnp.zeros((1, C, 1, 1), dtype=jnp.float32)
    moving_var = jnp.ones((1, C, 1, 1), dtype=jnp.float32)

    y_ref, mm_ref, mv_ref = batch_norm_ref(x, gamma, beta, moving_mean, moving_var)
    y, new_mm, new_mv = batch_norm_pallas(x, gamma, beta, moving_mean, moving_var)
    jax.block_until_ready((y, new_mm, new_mv))

    assert y.shape == x.shape
    assert jnp.allclose(y, y_ref, atol=1e-5, rtol=1e-5)
    assert jnp.allclose(new_mm, mm_ref, atol=1e-5, rtol=1e-5)
    assert jnp.allclose(new_mv, mv_ref, atol=1e-5, rtol=1e-5)

    # ---- case 2: force the tiled two-pass path (multi-step grid) ----------
    N2, C2, H2, W2 = 4, 8, 32, 32
    x2 = jax.random.normal(kx2, (N2, C2, H2, W2), dtype=jnp.float32)
    g2 = jnp.ones((1, C2, 1, 1), jnp.float32)
    b2 = jnp.zeros((1, C2, 1, 1), jnp.float32)
    mm2 = jnp.zeros((1, C2, 1, 1), jnp.float32)
    mv2 = jnp.ones((1, C2, 1, 1), jnp.float32)

    y2_ref, mm2_ref, mv2_ref = batch_norm_ref(x2, g2, b2, mm2, mv2)
    # Tiny tile budget so the (4, 2) grid with multi-step accumulation is hit.
    y2, nmm2, nmv2 = batch_norm_pallas(x2, g2, b2, mm2, mv2,
                                       force_two_pass=True,
                                       tile_budget_bytes=16 * 1024)
    jax.block_until_ready((y2, nmm2, nmv2))

    assert jnp.allclose(y2, y2_ref, atol=1e-5, rtol=1e-5)
    assert jnp.allclose(nmm2, mm2_ref, atol=1e-5, rtol=1e-5)
    assert jnp.allclose(nmv2, mv2_ref, atol=1e-5, rtol=1e-5)

    print("KERNEL_OK")
</pallas_src>

<mosaic_0001>
module attributes {stable_mosaic.version = 11 : i64} {
  func.func @_fused_kernel(%arg0: i32, %arg1: memref<2x4x256xf32, #tpu.memory_space<vmem>>, %arg2: memref<4x1xf32, #tpu.memory_space<vmem>>, %arg3: memref<4x1xf32, #tpu.memory_space<vmem>>, %arg4: memref<4x1xf32, #tpu.memory_space<vmem>>, %arg5: memref<4x1xf32, #tpu.memory_space<vmem>>, %arg6: memref<2x4x256xf32, #tpu.memory_space<vmem>>, %arg7: memref<4x1xf32, #tpu.memory_space<vmem>>, %arg8: memref<4x1xf32, #tpu.memory_space<vmem>>) attributes {dimension_semantics = [#tpu.dimension_semantics<arbitrary>], iteration_bounds = array<i64: 1>, scalar_prefetch = 0 : i64, scratch_operands = 0 : i64, tpu.core_type = #tpu.core_type<tc>, window_params = [{pipeline_mode = #tpu.pipeline_mode<synchronous>, transform_indices = @transform_0, window_bounds = array<i64: 2, 4, 256>}, {pipeline_mode = #tpu.pipeline_mode<synchronous>, transform_indices = @transform_1, window_bounds = array<i64: 4, 1>}, {pipeline_mode = #tpu.pipeline_mode<synchronous>, transform_indices = @transform_2, window_bounds = array<i64: 4, 1>}, {pipeline_mode = #tpu.pipeline_mode<synchronous>, transform_indices = @transform_3, window_bounds = array<i64: 4, 1>}, {pipeline_mode = #tpu.pipeline_mode<synchronous>, transform_indices = @transform_4, window_bounds = array<i64: 4, 1>}, {pipeline_mode = #tpu.pipeline_mode<synchronous>, transform_indices = @transform_5, window_bounds = array<i64: 2, 4, 256>}, {pipeline_mode = #tpu.pipeline_mode<synchronous>, transform_indices = @transform_6, window_bounds = array<i64: 4, 1>}, {pipeline_mode = #tpu.pipeline_mode<synchronous>, transform_indices = @transform_7, window_bounds = array<i64: 4, 1>}]} {
    %c0 = arith.constant 0 : index
    %c0_0 = arith.constant 0 : index
    %c0_1 = arith.constant 0 : index
    %0 = vector.load %arg1[%c0, %c0_0, %c0_1] : memref<2x4x256xf32, #tpu.memory_space<vmem>>, vector<2x4x256xf32>
    %cst = arith.constant dense<0.000000e+00> : vector<4x256xf32>
    %1 = vector.multi_reduction <add>, %0, %cst [0] : vector<2x4x256xf32> to vector<4x256xf32>
    %cst_2 = arith.constant dense<0.000000e+00> : vector<4xf32>
    %2 = vector.multi_reduction <add>, %1, %cst_2 [1] : vector<4x256xf32> to vector<4xf32>
    %3 = vector.shape_cast %2 : vector<4xf32> to vector<4x1xf32>
    %cst_3 = arith.constant 0.001953125 : f32
    %4 = vector.broadcast %cst_3 : f32 to vector<4x1xf32>
    %5 = arith.mulf %3, %4 : vector<4x1xf32>
    %6 = vector.shape_cast %5 : vector<4x1xf32> to vector<1x4x1xf32>
    %7 = vector.broadcast %6 : vector<1x4x1xf32> to vector<2x4x256xf32>
    %8 = arith.subf %0, %7 : vector<2x4x256xf32>
    %9 = arith.mulf %8, %8 : vector<2x4x256xf32>
    %cst_4 = arith.constant dense<0.000000e+00> : vector<4x256xf32>
    %10 = vector.multi_reduction <add>, %9, %cst_4 [0] : vector<2x4x256xf32> to vector<4x256xf32>
    %cst_5 = arith.constant dense<0.000000e+00> : vector<4xf32>
    %11 = vector.multi_reduction <add>, %10, %cst_5 [1] : vector<4x256xf32> to vector<4xf32>
    %12 = vector.shape_cast %11 : vector<4xf32> to vector<4x1xf32>
    %cst_6 = arith.constant 0.001953125 : f32
    %13 = vector.broadcast %cst_6 : f32 to vector<4x1xf32>
    %14 = arith.mulf %12, %13 : vector<4x1xf32>
    %cst_7 = arith.constant 9.99999974E-6 : f32
    %15 = vector.broadcast %cst_7 : f32 to vector<4x1xf32>
    %16 = arith.addf %14, %15 : vector<4x1xf32>
    %17 = math.rsqrt %16 : vector<4x1xf32>
    %c0_8 = arith.constant 0 : index
    %c0_9 = arith.constant 0 : index
    %18 = vector.load %arg2[%c0_8, %c0_9] : memref<4x1xf32, #tpu.memory_space<vmem>>, vector<4x1xf32>
    %19 = arith.mulf %18, %17 : vector<4x1xf32>
    %20 = vector.shape_cast %19 : vector<4x1xf32> to vector<1x4x1xf32>
    %21 = vector.broadcast %20 : vector<1x4x1xf32> to vector<2x4x256xf32>
    %22 = arith.mulf %8, %21 : vector<2x4x256xf32>
    %c0_10 = arith.constant 0 : index
    %c0_11 = arith.constant 0 : index
    %23 = vector.load %arg3[%c0_10, %c0_11] : memref<4x1xf32, #tpu.memory_space<vmem>>, vector<4x1xf32>
    %24 = vector.shape_cast %23 : vector<4x1xf32> to vector<1x4x1xf32>
    %25 = vector.broadcast %24 : vector<1x4x1xf32> to vector<2x4x256xf32>
    %26 = arith.addf %22, %25 : vector<2x4x256xf32>
    %c0_12 = arith.constant 0 : index
    %c0_13 = arith.constant 0 : index
    %c0_14 = arith.constant 0 : index
    %27 = vector.load %arg6[%c0_12, %c0_13, %c0_14] : memref<2x4x256xf32, #tpu.memory_space<vmem>>, vector<2x4x256xf32>
    tpu.vector_store %arg6[%c0_12, %c0_13, %c0_14], %26 {strides = array<i32>} : memref<2x4x256xf32, #tpu.memory_space<vmem>>, vector<2x4x256xf32>,
    %c0_15 = arith.constant 0 : index
    %c0_16 = arith.constant 0 : index
    %28 = vector.load %arg4[%c0_15, %c0_16] : memref<4x1xf32, #tpu.memory_space<vmem>>, vector<4x1xf32>
    %cst_17 = arith.constant 0.899999976 : f32
    %29 = vector.broadcast %cst_17 : f32 to vector<4x1xf32>
    %30 = arith.mulf %29, %28 : vector<4x1xf32>
    %cst_18 = arith.constant 1.000000e-01 : f32
    %31 = vector.broadcast %cst_18 : f32 to vector<4x1xf32>
    %32 = arith.mulf %31, %5 : vector<4x1xf32>
    %33 = arith.addf %30, %32 : vector<4x1xf32>
    %c0_19 = arith.constant 0 : index
    %c0_20 = arith.constant 0 : index
    %34 = vector.load %arg7[%c0_19, %c0_20] : memref<4x1xf32, #tpu.memory_space<vmem>>, vector<4x1xf32>
    tpu.vector_store %arg7[%c0_19, %c0_20], %33 {strides = array<i32>} : memref<4x1xf32, #tpu.memory_space<vmem>>, vector<4x1xf32>,
    %c0_21 = arith.constant 0 : index
    %c0_22 = arith.constant 0 : index
    %35 = vector.load %arg5[%c0_21, %c0_22] : memref<4x1xf32, #tpu.memory_space<vmem>>, vector<4x1xf32>
    %cst_23 = arith.constant 0.899999976 : f32
    %36 = vector.broadcast %cst_23 : f32 to vector<4x1xf32>
    %37 = arith.mulf %36, %35 : vector<4x1xf32>
    %cst_24 = arith.constant 1.000000e-01 : f32
    %38 = vector.broadcast %cst_24 : f32 to vector<4x1xf32>
    %39 = arith.mulf %38, %14 : vector<4x1xf32>
    %40 = arith.addf %37, %39 : vector<4x1xf32>
    %c0_25 = arith.constant 0 : index
    %c0_26 = arith.constant 0 : index
    %41 = vector.load %arg8[%c0_25, %c0_26] : memref<4x1xf32, #tpu.memory_space<vmem>>, vector<4x1xf32>
    tpu.vector_store %arg8[%c0_25, %c0_26], %40 {strides = array<i32>} : memref<4x1xf32, #tpu.memory_space<vmem>>, vector<4x1xf32>,
    return
  }
  func.func @transform_0(%arg0: i32) -> (i32, i32, i32) {
    %c0_i32 = arith.constant 0 : i32
    %c0_i32_0 = arith.constant 0 : i32
    %c0_i32_1 = arith.constant 0 : i32
    %c0_i32_2 = arith.constant 0 : i32
    return %c0_i32, %c0_i32_0, %c0_i32_1 : i32, i32, i32
  }
  func.func @transform_1(%arg0: i32) -> (i32, i32) {
    %c0_i32 = arith.constant 0 : i32
    %c0_i32_0 = arith.constant 0 : i32
    %c0_i32_1 = arith.constant 0 : i32
    return %c0_i32, %c0_i32_0 : i32, i32
  }
  func.func @transform_2(%arg0: i32) -> (i32, i32) {
    %c0_i32 = arith.constant 0 : i32
    %c0_i32_0 = arith.constant 0 : i32
    %c0_i32_1 = arith.constant 0 : i32
    return %c0_i32, %c0_i32_0 : i32, i32
  }
  func.func @transform_3(%arg0: i32) -> (i32, i32) {
    %c0_i32 = arith.constant 0 : i32
    %c0_i32_0 = arith.constant 0 : i32
    %c0_i32_1 = arith.constant 0 : i32
    return %c0_i32, %c0_i32_0 : i32, i32
  }
  func.func @transform_4(%arg0: i32) -> (i32, i32) {
    %c0_i32 = arith.constant 0 : i32
    %c0_i32_0 = arith.constant 0 : i32
    %c0_i32_1 = arith.constant 0 : i32
    return %c0_i32, %c0_i32_0 : i32, i32
  }
  func.func @transform_5(%arg0: i32) -> (i32, i32, i32) {
    %c0_i32 = arith.constant 0 : i32
    %c0_i32_0 = arith.constant 0 : i32
    %c0_i32_1 = arith.constant 0 : i32
    %c0_i32_2 = arith.constant 0 : i32
    return %c0_i32, %c0_i32_0, %c0_i32_1 : i32, i32, i32
  }
  func.func @transform_6(%arg0: i32) -> (i32, i32) {
    %c0_i32 = arith.constant 0 : i32
    %c0_i32_0 = arith.constant 0 : i32
    %c0_i32_1 = arith.constant 0 : i32
    return %c0_i32, %c0_i32_0 : i32, i32
  }
  func.func @transform_7(%arg0: i32) -> (i32, i32) {
    %c0_i32 = arith.constant 0 : i32
    %c0_i32_0 = arith.constant 0 : i32
    %c0_i32_1 = arith.constant 0 : i32
    return %c0_i32, %c0_i32_0 : i32, i32
  }
}

</mosaic_0001>

<llo_original>
// kernel: batch_norm_pallas.1
$region0: #{batch_norm_pallas.1}
  #allocation0 [shape = 'u32[]', space=smem, size = 0x4, offset = 0x4, fixed_abs, tag = 'smem constant byte address 0x4 - core index']
  #allocation1 [shape = 'u32[72,128]{1,0:T(1,128)}', space=vmem, size = 0x9000, scoped, tag = 'internal scratch']
  %s0 = inlined_call_operand.vmem [shape: f32[2,4,256], index: 0, kind: input, shape index: {}]
  %s1 = inlined_call_operand.vmem [shape: f32[4,1], index: 1, kind: input, shape index: {}]
  %s2 = inlined_call_operand.vmem [shape: f32[4,1], index: 2, kind: input, shape index: {}]
  %s3 = inlined_call_operand.vmem [shape: f32[4,1], index: 3, kind: input, shape index: {}]
  %s4 = inlined_call_operand.vmem [shape: f32[4,1], index: 4, kind: input, shape index: {}]
  %s5 = inlined_call_operand.vmem [shape: f32[2,4,256], index: 5, kind: output, shape index: {0}]
  %s6 = inlined_call_operand.vmem [shape: f32[4,1], index: 6, kind: output, shape index: {1}]
  %s7 = inlined_call_operand.vmem [shape: f32[4,1], index: 7, kind: output, shape index: {2}]
  %8 = xla_tuple %s5, %s6, %s7
  %s9 = sld [smem:[#allocation0]]
  $region46: #{batch_norm_pallas.1} parent=0
    _
  %s11 = ssub.s32 1, %s9
  %s12 = scalar_select 0, %s11, %s9
  // Predicated region
  $region2: #{batch_norm_pallas.1} parent=0 // pred_check
    _
  $region3: #{batch_norm_pallas.1} parent=0 // pred_check_branch
    %14 = sbr.rel (0) target = $region5
  $region4: #{batch_norm_pallas.1} parent=0 // pred_region
    _
  $region5: #{batch_norm_pallas.1} parent=0 // pred_fallthru
    _
  // Predicated region
  $region6: #{batch_norm_pallas.1} parent=0 // pred_check
    _
  $region7: #{batch_norm_pallas.1} parent=0 // pred_check_branch
    %16 = sbr.rel (0) target = $region9
  $region8: #{batch_norm_pallas.1} parent=0 // pred_region
    _
  $region9: #{batch_norm_pallas.1} parent=0 // pred_fallthru
    _
  // Predicated region
  $region10: #{batch_norm_pallas.1} parent=0 // pred_check
    _
  $region11: #{batch_norm_pallas.1} parent=0 // pred_check_branch
    %18 = sbr.rel (0) target = $region13
  $region12: #{batch_norm_pallas.1} parent=0 // pred_region
    _
  $region13: #{batch_norm_pallas.1} parent=0 // pred_fallthru
    _
  // Predicated region
  $region14: #{batch_norm_pallas.1} parent=0 // pred_check
    _
  $region15: #{batch_norm_pallas.1} parent=0 // pred_check_branch
    %20 = sbr.rel (0) target = $region17
  $region16: #{batch_norm_pallas.1} parent=0 // pred_region
    _
  $region17: #{batch_norm_pallas.1} parent=0 // pred_fallthru
    _
  // Predicated region
  $region18: #{batch_norm_pallas.1} parent=0 // pred_check
    _
  $region19: #{batch_norm_pallas.1} parent=0 // pred_check_branch
    %22 = sbr.rel (0) target = $region21
  $region20: #{batch_norm_pallas.1} parent=0 // pred_region
    _
  $region21: #{batch_norm_pallas.1} parent=0 // pred_fallthru
    _
  %v23 = vld [vmem:[%s0] sm:$0xff]
  %v24 = vld [vmem:[%s0 + $0x8] sm:$0xff]
  %27 = vst [vmem:[#allocation1] ss:$2 sm:$0xff] %v23
  %v28 = vld.sshfl [vmem:[#allocation1] sm:$0xff pattern:$0x75316420]
  %v29 = vld.sshfl [vmem:[#allocation1 + $0x8] sm:$0xff pattern:$0x75316420]
  %s30 = scalar_lea.vmem [#allocation1], 16
  %31 = vst [vmem:[%s30] ss:$2 sm:$0xff] %v24
  %v32 = vld.sshfl [vmem:[#allocation1 + $0x10] sm:$0xff pattern:$0x75316420]
  %v33 = vld.sshfl [vmem:[#allocation1 + $0x18] sm:$0xff pattern:$0x75316420]
  %vm38 = vcmask 1043456
  %v39 = vsel %vm38, %v28, 0.0
  %v40 = vsel %vm38, %v32, 0.0
  %v41 = vadd.f32 %v39, %v40
  %v42 = vsel %vm38, %v29, 0.0
  %v43 = vsel %vm38, %v33, 0.0
  %v44 = vadd.f32 %v42, %v43
  %v45 = vsel %vm38, %v41, 0.0
  %v46 = vsel %vm38, %v44, 0.0
  %v47 = vadd.f32 %v45, %v46
  %48 = vadd.xlane.f32.xlu0 %v47
  %v49 = vpop.xlane.xlu0 %48
  %v50 = vmul.f32 %v49, 0.001953125
  %v53 = vunpack.c.l.s4 839922192
  %v54 = vunpack.c.0.s8 %v53
  %v55 = vperm.slane %v50, %v54
  %v57 = vsub.f32 %v23, %v55
  %v58 = vsub.f32 %v24, %v55
  %v59 = vmul.f32 %v57, %v57
  %v60 = vmul.f32 %v58, %v58
  %63 = vst [vmem:[#allocation1] ss:$2 sm:$0xff] %v59
  %v64 = vld.sshfl [vmem:[#allocation1] sm:$0xff pattern:$0x75316420]
  %v65 = vld.sshfl [vmem:[#allocation1 + $0x8] sm:$0xff pattern:$0x75316420]
  %s66 = scalar_lea.vmem [#allocation1], 16
  %67 = vst [vmem:[%s66] ss:$2 sm:$0xff] %v60
  %v68 = vld.sshfl [vmem:[#allocation1 + $0x10] sm:$0xff pattern:$0x75316420]
  %v69 = vld.sshfl [vmem:[#allocation1 + $0x18] sm:$0xff pattern:$0x75316420]
  %v74 = vsel %vm38, %v64, 0.0
  %v75 = vsel %vm38, %v68, 0.0
  %v76 = vadd.f32 %v74, %v75
  %v77 = vsel %vm38, %v65, 0.0
  %v78 = vsel %vm38, %v69, 0.0
  %v79 = vadd.f32 %v77, %v78
  %v80 = vsel %vm38, %v76, 0.0
  %v81 = vsel %vm38, %v79, 0.0
  %v82 = vadd.f32 %v80, %v81
  %83 = vadd.xlane.f32.xlu0 %v82
  %v84 = vpop.xlane.xlu0 %83
  %v85 = vmul.f32 %v84, 0.001953125
  %v86 = vadd.f32 %v85, 1e-05
  %v87 = vrsqrt.pop %v86
  %v88 = vmul.f32 %v87, %v86
  %v89 = vmul.f32 %v88, %v87
  %v90 = vmul.f32 0.5, %v89
  %v91 = vsub.f32 1.5, %v90
  %v92 = vmul.f32 %v87, %v91
  %vm93 = vweird.f32 %v86
  %vm94 = vweird.f32 %v87
  %vm95 = vmor %vm93, %vm94
  %v96 = vsel %vm95, %v87, %v92
  %v97 = vld [vmem:[%s1] sm:$0xf]
  %v98 = vmul.f32 %v97, %v96
  %100 = vset.pattern.permute.xlu0 0
  %101 = vperm.xlu0 %100, %v98
  %v102 = vpop.permute.xlu0 %101
  %v104 = vunpack.c.l.s4 839922192
  %v105 = vunpack.c.0.s8 %v104
  %v106 = vperm.slane %v102, %v105
  %v108 = vmul.f32 %v57, %v106
  %v109 = vmul.f32 %v58, %v106
  %v110 = vld [vmem:[%s2] sm:$0xf]
  %112 = vset.pattern.permute.xlu0 0
  %113 = vperm.xlu0 %112, %v110
  %v114 = vpop.permute.xlu0 %113
  %v116 = vunpack.c.l.s4 839922192
  %v117 = vunpack.c.0.s8 %v116
  %v118 = vperm.slane %v114, %v117
  %v120 = vadd.f32 %v108, %v118
  %v121 = vadd.f32 %v109, %v118
  %122 = vst [vmem:[%s5] sm:$0xff] %v120
  %123 = vst [vmem:[%s5 + $0x8] sm:$0xff] %v121
  %v124 = vld [vmem:[%s3] sm:$0xf]
  %v125 = vmul.f32 %v124, 0.9
  %v126 = vmul.f32 %v50, 0.1
  %v127 = vadd.f32 %v125, %v126
  %vm128 = vcmask 3072
  %129 = vst.msk [vmem:[%s6] sm:$0xf] %vm128, %v127
  %v130 = vld [vmem:[%s4] sm:$0xf]
  %v131 = vmul.f32 %v130, 0.9
  %v132 = vmul.f32 %v85, 0.1
  %v133 = vadd.f32 %v131, %v132
  %134 = vst.msk [vmem:[%s7] sm:$0xf] %vm128, %v133
  // Predicated region
  $region22: #{batch_norm_pallas.1} parent=0 // pred_check
    _
  $region23: #{batch_norm_pallas.1} parent=0 // pred_check_branch
    %136 = sbr.rel (0) target = $region25
  $region24: #{batch_norm_pallas.1} parent=0 // pred_region
    _
  $region25: #{batch_norm_pallas.1} parent=0 // pred_fallthru
    _
  // Predicated region
  $region26: #{batch_norm_pallas.1} parent=0 // pred_check
    _
  $region27: #{batch_norm_pallas.1} parent=0 // pred_check_branch
    %138 = sbr.rel (0) target = $region29
  $region28: #{batch_norm_pallas.1} parent=0 // pred_region
    _
  $region29: #{batch_norm_pallas.1} parent=0 // pred_fallthru
    _
  // Predicated region
  $region30: #{batch_norm_pallas.1} parent=0 // pred_check
    _
  $region31: #{batch_norm_pallas.1} parent=0 // pred_check_branch
    %140 = sbr.rel (0) target = $region33
  $region32: #{batch_norm_pallas.1} parent=0 // pred_region
    _
  $region33: #{batch_norm_pallas.1} parent=0 // pred_fallthru
    _
  // Predicated region
  $region34: #{batch_norm_pallas.1} parent=0 // pred_check
    _
  $region35: #{batch_norm_pallas.1} parent=0 // pred_check_branch
    %142 = sbr.rel (0) target = $region37
  $region36: #{batch_norm_pallas.1} parent=0 // pred_region
    _
  $region37: #{batch_norm_pallas.1} parent=0 // pred_fallthru
    _
  // Predicated region
  $region38: #{batch_norm_pallas.1} parent=0 // pred_check
    _
  $region39: #{batch_norm_pallas.1} parent=0 // pred_check_branch
    %144 = sbr.rel (0) target = $region41
  $region40: #{batch_norm_pallas.1} parent=0 // pred_region
    _
  $region41: #{batch_norm_pallas.1} parent=0 // pred_fallthru
    _
  // Predicated region
  $region42: #{batch_norm_pallas.1} parent=0 // pred_check
    _
  $region43: #{batch_norm_pallas.1} parent=0 // pred_check_branch
    %146 = sbr.rel (0) target = $region45
  $region44: #{batch_norm_pallas.1} parent=0 // pred_region
    _
  $region45: #{batch_norm_pallas.1} parent=0 // pred_fallthru
    _

</llo_original>
